<compile_context>
chip_gen: v7x
topology: tpu7x:2x2x1
jax: 0.10.0
libtpu: 0.0.40
codegen_flags: <defaults>
</compile_context>

<pallas_src>
import functools

import jax
import jax.numpy as jnp
from jax.experimental import pallas as pl
from jax.experimental.pallas import tpu as pltpu


def _round_up(v, m):
    return (v + m - 1) // m * m


def gcn_kernel(a_ref, x_ref, p_ref, o_ref, *, pin, ph, po):
    """a_ref: (N,N) raw adjacency (no self loops), f32.
       x_ref: (N, pin) batch-packed inputs, compute dtype.
       p_ref: (pin + 8 + ph + 8, max(ph,po)) fused param slab, compute dtype:
              rows [0,pin)           -> block-diag W1 (lanes [0,ph))
              row  pin               -> packed b1     (lanes [0,ph))
              rows [pin+8,pin+8+ph)  -> block-diag W2 (lanes [0,po))
              row  pin+8+ph          -> packed b2     (lanes [0,po))
       o_ref: (N, po) lane-dense packed output, f32."""
    cdtype = x_ref.dtype
    N = a_ref.shape[0]

    # ---- fused graph normalization: D^-1/2 (A+I) D^-1/2 ------------------
    row_ids = jax.lax.broadcasted_iota(jnp.int32, (N, N), 0)
    col_ids = jax.lax.broadcasted_iota(jnp.int32, (N, N), 1)
    a = a_ref[...] + (row_ids == col_ids).astype(jnp.float32)      # A + I (VPU)
    deg = jnp.sum(a, axis=-1, keepdims=True)                       # (N,1)  XLU
    d = jnp.where(deg > 0.0,
                  jax.lax.rsqrt(jnp.where(deg > 0.0, deg, 1.0)),   # EUP, no inf
                  0.0)
    # A_norm @ M == (d * (A+I)) @ (d * M): left-scaled adjacency, row-scaled
    # operand -- no transpose of d needed.
    a_mix = (d * a).astype(cdtype)                                 # (N, N)

    # ---- fused param slab (static, sublane-aligned row slices) -----------
    w1 = p_ref[0:pin, 0:ph]                                        # (pin, ph)
    b1 = p_ref[pin:pin + 1, 0:ph].astype(jnp.float32)              # (1, ph)
    w2 = p_ref[pin + 8:pin + 8 + ph, 0:po]                         # (ph, po)
    b2 = p_ref[pin + 8 + ph:pin + 8 + ph + 1, 0:po].astype(jnp.float32)

    x = x_ref[...]                                                 # (N, pin)

    # ---- layer 1: batched linear (block-diag W1) -> graph mix -> relu ----
    # (Layer-1 reassociation (A@X)@W1 is gated off at this size; see header.)
    z1 = jnp.dot(x, w1, preferred_element_type=jnp.float32) + b1   # (N, ph) f32
    h1 = jnp.maximum(
        jnp.dot(a_mix, (d * z1).astype(cdtype),
                preferred_element_type=jnp.float32), 0.0)          # (N, ph) f32

    # ---- layer 2: batched linear (block-diag W2) -> graph mix -> relu ----
    z2 = jnp.dot(h1.astype(cdtype), w2,
                 preferred_element_type=jnp.float32) + b2          # (N, po) f32
    h2 = jnp.maximum(
        jnp.dot(a_mix, (d * z2).astype(cdtype),
                preferred_element_type=jnp.float32), 0.0)          # (N, po) f32

    o_ref[...] = h2                                                # one dense store


def gcn_forward(graph, flow_x, w1, b1, w2, b2, *, matmul_dtype=jnp.float32):
    """graph: (N, N); flow_x: (B, N, H, D).  Returns (B, N, 1, out_c)."""
    B, N = flow_x.shape[0], flow_x.shape[1]
    x = flow_x.reshape(B, N, -1).astype(jnp.float32)               # view(B, N, -1)
    in_c = x.shape[-1]
    hid_c, out_c = w1.shape[0], w2.shape[0]

    # Padded packed widths: contraction dim to a sublane multiple, packed
    # hidden/output lane dims to full 128-lane tiles (lane-dense stores/mixes).
    pin = _round_up(B * in_c, 8)
    ph = _round_up(B * hid_c, 128)
    po = _round_up(B * out_c, 128)
    pl_w = max(ph, po)                                             # slab lane width

    # Batch packed onto lanes: (N, B*in_c) zero-padded to pin lanes.
    x_packed = jnp.zeros((N, pin), jnp.float32)
    x_packed = x_packed.at[:, :B * in_c].set(x.transpose(1, 0, 2).reshape(N, B * in_c))

    # Block-diagonal per-batch copies of the Linear weights (PyTorch layout is
    # (out, in) -> transpose so the kernel does x @ W directly).
    eye_b = jnp.eye(B, dtype=jnp.float32)
    w1_bd = jnp.kron(eye_b, w1.T.astype(jnp.float32))              # (B*in_c, B*hid_c)
    w2_bd = jnp.kron(eye_b, w2.T.astype(jnp.float32))              # (B*hid_c, B*out_c)
    b1_p = jnp.tile(b1.astype(jnp.float32), (B,))                  # (B*hid_c,)
    b2_p = jnp.tile(b2.astype(jnp.float32), (B,))                  # (B*out_c,)

    # Fused parameter slab (3 input DMAs total instead of 6+).
    rows = pin + 8 + ph + 8
    params = jnp.zeros((rows, pl_w), jnp.float32)
    params = params.at[:B * in_c, :B * hid_c].set(w1_bd)
    params = params.at[pin, :B * hid_c].set(b1_p)
    params = params.at[pin + 8:pin + 8 + B * hid_c, :B * out_c].set(w2_bd)
    params = params.at[pin + 8 + ph, :B * out_c].set(b2_p)

    # bf16 matmul operands / f32 accumulate+epilogue when requested.
    x_packed = x_packed.astype(matmul_dtype)
    params = params.astype(matmul_dtype)
    graph_f32 = graph.astype(jnp.float32)

    itemsize = jnp.dtype(matmul_dtype).itemsize
    flops = 2 * N * (pin * ph + N * ph + ph * po + N * po)
    bytes_accessed = (4 * N * N + itemsize * (N * pin + rows * pl_w) + 4 * N * po)

    vmem = pl.BlockSpec(memory_space=pltpu.MemorySpace.VMEM)
    out_packed = pl.pallas_call(
        functools.partial(gcn_kernel, pin=pin, ph=ph, po=po),
        out_shape=jax.ShapeDtypeStruct((N, po), jnp.float32),
        in_specs=[vmem, vmem, vmem],
        out_specs=vmem,
        cost_estimate=pl.CostEstimate(flops=flops, transcendentals=N,
                                      bytes_accessed=bytes_accessed),
    )(graph_f32, x_packed, params)

    # Unpack lane-padded slab: (N, po) -> (B, N, out_c) -> unsqueeze(2).
    out = out_packed[:, :B * out_c].reshape(N, B, out_c).transpose(1, 0, 2)
    return out[:, :, None, :]


def process_graph_ref(graph_data):
    """Pure-JAX D^{-1/2}(A+I)D^{-1/2}, matching GCN.process_graph (inf-safe)."""
    n = graph_data.shape[0]
    a = graph_data + jnp.eye(n, dtype=graph_data.dtype)
    deg = jnp.sum(a, axis=-1)
    d_inv_sqrt = jnp.where(deg > 0, 1.0 / jnp.sqrt(jnp.where(deg > 0, deg, 1.0)), 0.0)
    return d_inv_sqrt[:, None] * a * d_inv_sqrt[None, :]


if __name__ == "__main__":
    # Small shapes consistent with the module's forward:
    #   flow_x: (B, N, H, D) -> viewed as (B, N, in_c) with in_c = H*D
    B, N, H, D = 2, 16, 8, 1
    in_c, hid_c, out_c = H * D, 32, 16

    key = jax.random.PRNGKey(0)
    k_graph, k_flow, k_w1, k_b1, k_w2, k_b2 = jax.random.split(key, 6)

    # Non-negative adjacency (like a traffic graph); self loops added in-kernel.
    raw = jax.random.uniform(k_graph, (N, N), dtype=jnp.float32)
    graph = (raw > 0.6).astype(jnp.float32)
    graph = graph * (1.0 - jnp.eye(N, dtype=jnp.float32))

    flow_x = jax.random.normal(k_flow, (B, N, H, D), dtype=jnp.float32)

    # PyTorch Linear layout: weight (out, in), bias (out,).
    w1 = jax.random.uniform(k_w1, (hid_c, in_c), minval=-(in_c ** -0.5),
                            maxval=in_c ** -0.5, dtype=jnp.float32)
    b1 = jax.random.uniform(k_b1, (hid_c,), minval=-(in_c ** -0.5),
                            maxval=in_c ** -0.5, dtype=jnp.float32)
    w2 = jax.random.uniform(k_w2, (out_c, hid_c), minval=-(hid_c ** -0.5),
                            maxval=hid_c ** -0.5, dtype=jnp.float32)
    b2 = jax.random.uniform(k_b2, (out_c,), minval=-(hid_c ** -0.5),
                            maxval=hid_c ** -0.5, dtype=jnp.float32)

    # Pure-JAX reference (same math, no Pallas).
    a_norm = process_graph_ref(graph)
    x_ref = flow_x.reshape(B, N, -1)
    h1_ref = jax.nn.relu(jnp.einsum("nm,bmf->bnf", a_norm, x_ref @ w1.T + b1))
    h2_ref = jax.nn.relu(jnp.einsum("nm,bmf->bnf", a_norm, h1_ref @ w2.T + b2))
    ref = h2_ref[:, :, None, :]

    # f32 matmul operands: tight check.
    out_f32 = gcn_forward(graph, flow_x, w1, b1, w2, b2, matmul_dtype=jnp.float32)
    out_f32 = jax.block_until_ready(out_f32)
    assert out_f32.shape == (B, N, 1, out_c), out_f32.shape
    assert jnp.allclose(out_f32, ref, atol=1e-5, rtol=1e-5)

    # bf16 matmul operands, f32 accumulation/epilogue: loose check.
    out_bf16 = gcn_forward(graph, flow_x, w1, b1, w2, b2, matmul_dtype=jnp.bfloat16)
    out_bf16 = jax.block_until_ready(out_bf16)
    assert out_bf16.shape == (B, N, 1, out_c), out_bf16.shape
    assert jnp.allclose(out_bf16, ref, atol=5e-2, rtol=5e-2)

    print("KERNEL_OK")
</pallas_src>

<mosaic_0001>
module attributes {stable_mosaic.version = 11 : i64} {
  func.func @gcn_kernel(%arg0: memref<16x16xf32, #tpu.memory_space<vmem>>, %arg1: memref<16x16xf32, #tpu.memory_space<vmem>>, %arg2: memref<160x128xf32, #tpu.memory_space<vmem>>, %arg3: memref<16x128xf32, #tpu.memory_space<vmem>>) attributes {dimension_semantics = [], scalar_prefetch = 0 : i64, scratch_operands = 0 : i64, tpu.core_type = #tpu.core_type<tc>} {
    %0 = tpu.iota {dimensions = array<i32: 0>} : vector<16x16xi32>
    %1 = tpu.iota {dimensions = array<i32: 1>} : vector<16x16xi32>
    %c0 = arith.constant 0 : index
    %c0_0 = arith.constant 0 : index
    %2 = vector.load %arg0[%c0, %c0_0] : memref<16x16xf32, #tpu.memory_space<vmem>>, vector<16x16xf32>
    %3 = arith.cmpi eq, %0, %1 : vector<16x16xi32>
    %4 = arith.extui %3 : vector<16x16xi1> to vector<16x16xi32>
    %5 = arith.sitofp %4 : vector<16x16xi32> to vector<16x16xf32>
    %6 = arith.addf %2, %5 : vector<16x16xf32>
    %cst = arith.constant dense<0.000000e+00> : vector<16xf32>
    %7 = vector.multi_reduction <add>, %6, %cst [1] : vector<16x16xf32> to vector<16xf32>
    %8 = vector.shape_cast %7 : vector<16xf32> to vector<16x1xf32>
    %cst_1 = arith.constant 0.000000e+00 : f32
    %9 = vector.broadcast %cst_1 : f32 to vector<16x1xf32>
    %10 = arith.cmpf ogt, %8, %9 : vector<16x1xf32>
    %cst_2 = arith.constant 0.000000e+00 : f32
    %11 = vector.broadcast %cst_2 : f32 to vector<16x1xf32>
    %12 = arith.cmpf ogt, %8, %11 : vector<16x1xf32>
    %cst_3 = arith.constant 1.000000e+00 : f32
    %13 = vector.broadcast %cst_3 : f32 to vector<16x1xf32>
    %14 = arith.select %12, %8, %13 : vector<16x1xi1>, vector<16x1xf32>
    %15 = math.rsqrt %14 : vector<16x1xf32>
    %cst_4 = arith.constant 0.000000e+00 : f32
    %16 = vector.broadcast %cst_4 : f32 to vector<16x1xf32>
    %17 = arith.select %10, %15, %16 : vector<16x1xi1>, vector<16x1xf32>
    %18 = vector.broadcast %17 : vector<16x1xf32> to vector<16x16xf32>
    %19 = arith.mulf %18, %6 : vector<16x16xf32>
    %c0_5 = arith.constant 0 : index
    %c0_6 = arith.constant 0 : index
    %20 = vector.load %arg2[%c0_5, %c0_6] : memref<160x128xf32, #tpu.memory_space<vmem>>, vector<16x128xf32>
    %c16 = arith.constant 16 : index
    %c0_7 = arith.constant 0 : index
    %21 = vector.load %arg2[%c16, %c0_7] : memref<160x128xf32, #tpu.memory_space<vmem>>, vector<1x128xf32>
    %c24 = arith.constant 24 : index
    %c0_8 = arith.constant 0 : index
    %22 = vector.load %arg2[%c24, %c0_8] : memref<160x128xf32, #tpu.memory_space<vmem>>, vector<128x128xf32>
    %c152 = arith.constant 152 : index
    %c0_9 = arith.constant 0 : index
    %23 = vector.load %arg2[%c152, %c0_9] : memref<160x128xf32, #tpu.memory_space<vmem>>, vector<1x128xf32>
    %c0_10 = arith.constant 0 : index
    %c0_11 = arith.constant 0 : index
    %24 = vector.load %arg1[%c0_10, %c0_11] : memref<16x16xf32, #tpu.memory_space<vmem>>, vector<16x16xf32>
    %cst_12 = arith.constant dense<0.000000e+00> : vector<16x128xf32>
    %25 = tpu.matmul %24, %20, %cst_12 {dimension_numbers = #tpu.dot_dimension_numbers<[1], [0], [0], [1], [0, 0, 1, 1], [], []>} : vector<16x16xf32>, vector<16x128xf32>, vector<16x128xf32> -> vector<16x128xf32>
    %26 = vector.broadcast %21 : vector<1x128xf32> to vector<16x128xf32>
    %27 = arith.addf %25, %26 : vector<16x128xf32>
    %28 = vector.broadcast %17 : vector<16x1xf32> to vector<16x128xf32>
    %29 = arith.mulf %28, %27 : vector<16x128xf32>
    %cst_13 = arith.constant dense<0.000000e+00> : vector<16x128xf32>
    %30 = tpu.matmul %19, %29, %cst_13 {dimension_numbers = #tpu.dot_dimension_numbers<[1], [0], [0], [1], [0, 0, 1, 1], [], []>} : vector<16x16xf32>, vector<16x128xf32>, vector<16x128xf32> -> vector<16x128xf32>
    %cst_14 = arith.constant 0.000000e+00 : f32
    %31 = vector.broadcast %cst_14 : f32 to vector<16x128xf32>
    %32 = arith.maximumf %30, %31 : vector<16x128xf32>
    %cst_15 = arith.constant dense<0.000000e+00> : vector<16x128xf32>
    %33 = tpu.matmul %32, %22, %cst_15 {dimension_numbers = #tpu.dot_dimension_numbers<[1], [0], [0], [1], [0, 0, 1, 1], [], []>} : vector<16x128xf32>, vector<128x128xf32>, vector<16x128xf32> -> vector<16x128xf32>
    %34 = vector.broadcast %23 : vector<1x128xf32> to vector<16x128xf32>
    %35 = arith.addf %33, %34 : vector<16x128xf32>
    %36 = vector.broadcast %17 : vector<16x1xf32> to vector<16x128xf32>
    %37 = arith.mulf %36, %35 : vector<16x128xf32>
    %cst_16 = arith.constant dense<0.000000e+00> : vector<16x128xf32>
    %38 = tpu.matmul %19, %37, %cst_16 {dimension_numbers = #tpu.dot_dimension_numbers<[1], [0], [0], [1], [0, 0, 1, 1], [], []>} : vector<16x16xf32>, vector<16x128xf32>, vector<16x128xf32> -> vector<16x128xf32>
    %cst_17 = arith.constant 0.000000e+00 : f32
    %39 = vector.broadcast %cst_17 : f32 to vector<16x128xf32>
    %40 = arith.maximumf %38, %39 : vector<16x128xf32>
    %c0_18 = arith.constant 0 : index
    %c0_19 = arith.constant 0 : index
    %41 = vector.load %arg3[%c0_18, %c0_19] : memref<16x128xf32, #tpu.memory_space<vmem>>, vector<16x128xf32>
    tpu.vector_store %arg3[%c0_18, %c0_19], %40 {strides = array<i32>} : memref<16x128xf32, #tpu.memory_space<vmem>>, vector<16x128xf32>,
    return
  }
}

</mosaic_0001>

<llo_original>
// kernel: tpu_custom_call.1
$region0: #{tpu_custom_call.1}
  #allocation0 [shape = 'u32[]', space=smem, size = 0x4, offset = 0x4, fixed_abs, tag = 'smem constant byte address 0x4 - core index']
  #allocation1 [shape = 'u32[144,128]{1,0:T(1,128)}', space=vmem, size = 0x12000, scoped, tag = 'internal scratch']
  %s0 = inlined_call_operand.hbm [shape: f32[16,16], index: 0, kind: input, shape index: {}]
  %s1 = inlined_call_operand.hbm [shape: f32[16,16], index: 1, kind: input, shape index: {}]
  %s2 = inlined_call_operand.hbm [shape: f32[160,128], index: 2, kind: input, shape index: {}]
  %s3 = inlined_call_operand.hbm [shape: f32[16,128], index: 3, kind: output, shape index: {}]
  %s4 = sld [smem:[#allocation0]]
  $region34: #{tpu_custom_call.1} parent=0
    _
  %s6 = ssub.s32 1, %s4
  %s7 = scalar_select 0, %s6, %s4
  $region1: #{tpu_custom_call.1} parent=0
    #allocation2 [shape = 'u8[8192]{0}', space=vmem, size = 0x2000, scoped, tag = 'input window, operand 0, single buffered']
    #allocation3 [shape = 's32[1]{0}', space=sflag, size = 0x4, scoped, tag = 'scoped memory for tpu_custom_call.1']
    #allocation4 [shape = 's32[1]{0}', space=sflag, size = 0x4, scoped, tag = 'scoped memory for tpu_custom_call.1']
    #allocation5 [shape = 'u8[8192]{0}', space=vmem, size = 0x2000, scoped, tag = 'input window, operand 1, single buffered']
    #allocation6 [shape = 's32[1]{0}', space=sflag, size = 0x4, scoped, tag = 'scoped memory for tpu_custom_call.1']
    #allocation7 [shape = 'u8[81920]{0}', space=vmem, size = 0x14000, scoped, tag = 'input window, operand 2, single buffered']
    #allocation8 [shape = 'u8[8192]{0}', space=vmem, size = 0x2000, scoped, tag = 'output window, operand 0, single buffered']
    %8 = vsyncpa [#allocation3], 0
    %9 = vsyncpa [#allocation6], 0
    %10 = vsyncpa [#allocation4], 0
    // Predicated region
    $region2: #{tpu_custom_call.1} parent=1 // pred_check
      _
    $region3: #{tpu_custom_call.1} parent=1 // pred_check_branch
      %12 = sbr.rel (0) target = $region5
    $region4: #{tpu_custom_call.1} parent=1 // pred_region
      %s14 = ssub.s32 256, 256
      %15 = vsyncadd [#allocation3], %s14
      %s16 = sshll.u32 [#allocation2], 4
      %s17 = int_to_ptr.vmem [resolvable:$true] %s16
      %22 = dma.hbm_to_vmem [thread:$0]  %s0, 256, %s17, [#allocation3], 128, 128, 8
    $region5: #{tpu_custom_call.1} parent=1 // pred_fallthru
      _
    // Predicated region
    $region6: #{tpu_custom_call.1} parent=1 // pred_check
      _
    $region7: #{tpu_custom_call.1} parent=1 // pred_check_branch
      %24 = sbr.rel (0) target = $region9
    $region8: #{tpu_custom_call.1} parent=1 // pred_region
      %s26 = ssub.s32 256, 256
      %27 = vsyncadd [#allocation6], %s26
      %s28 = sshll.u32 [#allocation5], 4
      %s29 = int_to_ptr.vmem [resolvable:$true] %s28
      %34 = dma.hbm_to_vmem [thread:$0]  %s1, 256, %s29, [#allocation6], 128, 128, 8
    $region9: #{tpu_custom_call.1} parent=1 // pred_fallthru
      _
    // Predicated region
    $region10: #{tpu_custom_call.1} parent=1 // pred_check
      _
    $region11: #{tpu_custom_call.1} parent=1 // pred_check_branch
      %36 = sbr.rel (0) target = $region13
    $region12: #{tpu_custom_call.1} parent=1 // pred_region
      %s38 = ssub.s32 2560, 2560
      %39 = vsyncadd [#allocation6], %s38
      %s40 = sshll.u32 [#allocation7], 4
      %s41 = int_to_ptr.vmem [resolvable:$true] %s40
      %46 = dma.hbm_to_vmem [thread:$0]  %s2, 2560, %s41, [#allocation6], 128, 128, 8
    $region13: #{tpu_custom_call.1} parent=1 // pred_fallthru
      _
    // Predicated region
    $region14: #{tpu_custom_call.1} parent=1 // pred_check
      _
    $region15: #{tpu_custom_call.1} parent=1 // pred_check_branch
      %48 = sbr.rel (0) target = $region17
    $region16: #{tpu_custom_call.1} parent=1 // pred_region
      %49 = dma.done [#allocation3], 256
    $region17: #{tpu_custom_call.1} parent=1 // pred_fallthru
      _
    // Predicated region
    $region18: #{tpu_custom_call.1} parent=1 // pred_check
      _
    $region19: #{tpu_custom_call.1} parent=1 // pred_check_branch
      %51 = sbr.rel (0) target = $region21
    $region20: #{tpu_custom_call.1} parent=1 // pred_region
      %52 = dma.done [#allocation6], 256
    $region21: #{tpu_custom_call.1} parent=1 // pred_fallthru
      _
    // Predicated region
    $region22: #{tpu_custom_call.1} parent=1 // pred_check
      _
    $region23: #{tpu_custom_call.1} parent=1 // pred_check_branch
      %54 = sbr.rel (0) target = $region25
    $region24: #{tpu_custom_call.1} parent=1 // pred_region
      %55 = dma.done [#allocation6], 2560
    $region25: #{tpu_custom_call.1} parent=1 // pred_fallthru
      _
    %v56 = vlaneseq
    %v57 = vshrl.u32 %v56, 7
    %v58 = vadd.s32 %v57, 8
    %v59 = vlaneseq
    %v60 = vand.u32 %v59, 127
    %v61 = vld [vmem:[#allocation2] sm:$0xff]
    %v62 = vld [vmem:[#allocation2 + $0x8] sm:$0xff]
    %vm63 = vcmp.eq.s32.totalorder %v57, %v60
    %vm64 = vcmp.eq.s32.totalorder %v58, %v60
    %v65 = vsel %vm63, 1, 0
    %v66 = vsel %vm64, 1, 0
    %v67 = vcvt.s32.f32 %v65
    %v68 = vcvt.s32.f32 %v66
    %v69 = vadd.f32 %v61, %v67
    %v70 = vadd.f32 %v62, %v68
    %vm71 = vcmask 130048
    %v72 = vsel %vm71, %v69, 0.0
    %73 = vadd.xlane.f32.xlu0 %v72
    %v74 = vpop.xlane.xlu0 %73
    %v75 = vsel %vm71, %v70, 0.0
    %76 = vadd.xlane.f32.xlu0 %v75
    %v77 = vpop.xlane.xlu0 %76
    %vm78 = vcmp.gt.f32.partialorder %v74, 0.0
    %vm79 = vcmp.gt.f32.partialorder %v77, 0.0
    %v80 = vsel %vm78, %v74, 1.0
    %v81 = vsel %vm79, %v77, 1.0
    %v82 = vrsqrt.pop %v80
    %v83 = vrsqrt.pop %v81
    %v84 = vsel %vm78, %v82, 0.0
    %v85 = vsel %vm79, %v83, 0.0
    %v86 = vmul.f32 %v84, %v69
    %v87 = vmul.f32 %v85, %v70
    %v88 = vld [vmem:[#allocation7] sm:$0xff]
    %v89 = vld [vmem:[#allocation7 + $0x8] sm:$0xff]
    %v90 = vld [vmem:[#allocation7 + $0x10] sm:$0x1]
    %v91 = vld [vmem:[#allocation7 + $0x18] sm:$0xff]
    %v92 = vld [vmem:[#allocation7 + $0x20] sm:$0xff]
    %v93 = vld [vmem:[#allocation7 + $0x28] sm:$0xff]
    %v94 = vld [vmem:[#allocation7 + $0x30] sm:$0xff]
    %v95 = vld [vmem:[#allocation7 + $0x38] sm:$0xff]
    %v96 = vld [vmem:[#allocation7 + $0x40] sm:$0xff]
    %v97 = vld [vmem:[#allocation7 + $0x48] sm:$0xff]
    %v98 = vld [vmem:[#allocation7 + $0x50] sm:$0xff]
    %v99 = vld [vmem:[#allocation7 + $0x58] sm:$0xff]
    %v100 = vld [vmem:[#allocation7 + $0x60] sm:$0xff]
    %v101 = vld [vmem:[#allocation7 + $0x68] sm:$0xff]
    %v102 = vld [vmem:[#allocation7 + $0x70] sm:$0xff]
    %v103 = vld [vmem:[#allocation7 + $0x78] sm:$0xff]
    %v104 = vld [vmem:[#allocation7 + $0x80] sm:$0xff]
    %v105 = vld [vmem:[#allocation7 + $0x88] sm:$0xff]
    %v106 = vld [vmem:[#allocation7 + $0x90] sm:$0xff]
    %v107 = vld [vmem:[#allocation7 + $0x98] sm:$0x1]
    %v108 = vld [vmem:[#allocation5] sm:$0xff]
    %v109 = vld [vmem:[#allocation5 + $0x8] sm:$0xff]
    %v110 = vlaneseq
    %v111 = vshrl.u32 %v110, 7
    %v112 = vsub.s32 0, %v111
    %v113 = vrot.slane %v90, %v112
    %v115 = vsel %vm71, %v108, 0
    %v118 = vsel %vm71, %v109, 0
    %120 = vmatprep.subr.mxu0 0.0
    %121 = vmatpush1.msra.mxu0 %v88
    %122 = vmatprep.subr.mxu0 0.0
    %123 = vmatpush1.msra.mxu0 %v89
    %124 = vmatprep.subr.mxu0 0.0
    %125 = vmatpush1.msra.mxu0 0.0
    %126 = vmatprep.subr.mxu0 0.0
    %127 = vmatpush1.msra.mxu0 0.0
    %128 = vmatprep.subr.mxu0 0.0
    %129 = vmatpush1.msra.mxu0 0.0
    %130 = vmatprep.subr.mxu0 0.0
    %131 = vmatpush1.msra.mxu0 0.0
    %132 = vmatprep.subr.mxu0 0.0
    %133 = vmatpush1.msra.mxu0 0.0
    %134 = vmatprep.subr.mxu0 0.0
    %135 = vmatpush1.msra.mxu0 0.0
    %136 = vmatprep.subr.mxu0 0.0
    %137 = vmatpush1.msra.mxu0 0.0
    %138 = vmatprep.subr.mxu0 0.0
    %139 = vmatpush1.msra.mxu0 0.0
    %140 = vmatprep.subr.mxu0 0.0
    %141 = vmatpush1.msra.mxu0 0.0
    %142 = vmatprep.subr.mxu0 0.0
    %143 = vmatpush1.msra.mxu0 0.0
    %144 = vmatprep.subr.mxu0 0.0
    %145 = vmatpush1.msra.mxu0 0.0
    %146 = vmatprep.subr.mxu0 0.0
    %147 = vmatpush1.msra.mxu0 0.0
    %148 = vmatprep.subr.mxu0 0.0
    %149 = vmatpush1.msra.mxu0 0.0
    %150 = vmatprep.subr.mxu0 0.0
    %151 = vmatpush1.msra.mxu0 0.0
    %152 = vmatprep.subr.mxu0 0.0
    %153 = vmatpush1.msra.mxu0 0.0
    %154 = vmatprep.subr.mxu0 0.0
    %155 = vmatpush1.msra.mxu0 0.0
    %156 = vmatprep.subr.mxu0 0.0
    %157 = vmatpush1.msra.mxu0 0.0
    %158 = vmatprep.subr.mxu0 0.0
    %159 = vmatpush1.msra.mxu0 0.0
    %160 = vmatprep.subr.mxu0 0.0
    %161 = vmatpush1.msra.mxu0 0.0
    %162 = vmatprep.subr.mxu0 0.0
    %163 = vmatpush1.msra.mxu0 0.0
    %164 = vmatprep.subr.mxu0 0.0
    %165 = vmatpush1.msra.mxu0 0.0
    %166 = vmatprep.subr.mxu0 0.0
    %167 = vmatpush1.msra.mxu0 0.0
    %168 = vmatprep.subr.mxu0 0.0
    %169 = vmatpush1.msra.mxu0 0.0
    %170 = vmatprep.subr.mxu0 0.0
    %171 = vmatpush1.msra.mxu0 0.0
    %172 = vmatprep.subr.mxu0 0.0
    %173 = vmatpush1.msra.mxu0 0.0
    %174 = vmatprep.subr.mxu0 0.0
    %175 = vmatpush1.msra.mxu0 0.0
    %176 = vmatprep.subr.mxu0 0.0
    %177 = vmatpush1.msra.mxu0 0.0
    %178 = vmatprep.subr.mxu0 0.0
    %179 = vmatpush1.msra.mxu0 0.0
    %180 = vmatprep.subr.mxu0 0.0
    %181 = vmatpush1.msra.mxu0 0.0
    %182 = vmatprep.subr.mxu0 0.0
    %183 = vmatpush1.msra.mxu0 0.0
    %184 = vmatprep.mubr.f32.mxu0 0.0
    %185 = vmatmul.mubr.f32.gmra.mrb[0].mxu0 %v115
    %v186 = vpop.f32.mrb[0].mxu0
    %v187 = vadd.f32 %v113, %v186
    %v188 = vpop.f32.mrb[0].mxu0
    %189 = vmatprep.mubr.f32.mxu0 0.0
    %190 = vmatmul.mubr.f32.gmra.mrb[0].mxu0 %v118
    %v191 = vpop.f32.mrb[0].mxu0
    %v192 = vadd.f32 %v113, %v191
    %v193 = vpop.f32.mrb[0].mxu0
    %194 = vdwg.mxu0
    %v195 = vmul.f32 %v84, %v187
    %v196 = vmul.f32 %v85, %v192
    %v198 = vsel %vm71, %v86, 0
    %v201 = vsel %vm71, %v87, 0
    %203 = vmatprep.subr.mxu0 0.0
    %204 = vmatpush1.msra.mxu0 %v195
    %205 = vmatprep.subr.mxu0 0.0
    %206 = vmatpush1.msra.mxu0 %v196
    %207 = vmatprep.subr.mxu0 0.0
    %208 = vmatpush1.msra.mxu0 0.0
    %209 = vmatprep.subr.mxu0 0.0
    %210 = vmatpush1.msra.mxu0 0.0
    %211 = vmatprep.subr.mxu0 0.0
    %212 = vmatpush1.msra.mxu0 0.0
    %213 = vmatprep.subr.mxu0 0.0
    %214 = vmatpush1.msra.mxu0 0.0
    %215 = vmatprep.subr.mxu0 0.0
    %216 = vmatpush1.msra.mxu0 0.0
    %217 = vmatprep.subr.mxu0 0.0
    %218 = vmatpush1.msra.mxu0 0.0
    %219 = vmatprep.subr.mxu0 0.0
    %220 = vmatpush1.msra.mxu0 0.0
    %221 = vmatprep.subr.mxu0 0.0
    %222 = vmatpush1.msra.mxu0 0.0
    %223 = vmatprep.subr.mxu0 0.0
    %224 = vmatpush1.msra.mxu0 0.0
    %225 = vmatprep.subr.mxu0 0.0
    %226 = vmatpush1.msra.mxu0 0.0
    %227 = vmatprep.subr.mxu0 0.0
    %228 = vmatpush1.msra.mxu0 0.0
    %229 = vmatprep.subr.mxu0 0.0
    %230 = vmatpush1.msra.mxu0 0.0
    %231 = vmatprep.subr.mxu0 0.0
    %232 = vmatpush1.msra.mxu0 0.0
    %233 = vmatprep.subr.mxu0 0.0
    %234 = vmatpush1.msra.mxu0 0.0
    %235 = vmatprep.subr.mxu0 0.0
    %236 = vmatpush1.msra.mxu0 0.0
    %237 = vmatprep.subr.mxu0 0.0
    %238 = vmatpush1.msra.mxu0 0.0
    %239 = vmatprep.subr.mxu0 0.0
    %240 = vmatpush1.msra.mxu0 0.0
    %241 = vmatprep.subr.mxu0 0.0
    %242 = vmatpush1.msra.mxu0 0.0
    %243 = vmatprep.subr.mxu0 0.0
    %244 = vmatpush1.msra.mxu0 0.0
    %245 = vmatprep.subr.mxu0 0.0
    %246 = vmatpush1.msra.mxu0 0.0
    %247 = vmatprep.subr.mxu0 0.0
    %248 = vmatpush1.msra.mxu0 0.0
    %249 = vmatprep.subr.mxu0 0.0
    %250 = vmatpush1.msra.mxu0 0.0
    %251 = vmatprep.subr.mxu0 0.0
    %252 = vmatpush1.msra.mxu0 0.0
    %253 = vmatprep.subr.mxu0 0.0
    %254 = vmatpush1.msra.mxu0 0.0
    %255 = vmatprep.subr.mxu0 0.0
    %256 = vmatpush1.msra.mxu0 0.0
    %257 = vmatprep.subr.mxu0 0.0
    %258 = vmatpush1.msra.mxu0 0.0
    %259 = vmatprep.subr.mxu0 0.0
    %260 = vmatpush1.msra.mxu0 0.0
    %261 = vmatprep.subr.mxu0 0.0
    %262 = vmatpush1.msra.mxu0 0.0
    %263 = vmatprep.subr.mxu0 0.0
    %264 = vmatpush1.msra.mxu0 0.0
    %265 = vmatprep.subr.mxu0 0.0
    %266 = vmatpush1.msra.mxu0 0.0
    %267 = vmatprep.mubr.f32.mxu0 0.0
    %268 = vmatmul.mubr.f32.gmra.mrb[0].mxu0 %v198
    %v269 = vpop.f32.mrb[0].mxu0
    %v270 = vadd.f32 0.0, %v269
    %v271 = vpop.f32.mrb[0].mxu0
    %272 = vmatprep.mubr.f32.mxu0 0.0
    %273 = vmatmul.mubr.f32.gmra.mrb[0].mxu0 %v201
    %v274 = vpop.f32.mrb[0].mxu0
    %v275 = vadd.f32 0.0, %v274
    %v276 = vpop.f32.mrb[0].mxu0
    %277 = vdwg.mxu0
    %v278 = vmax.f32 %v270, 0.0
    %v279 = vmax.f32 %v275, 0.0
    %v280 = vlaneseq
    %v281 = vshrl.u32 %v280, 7
    %v282 = vsub.s32 0, %v281
    %v283 = vrot.slane %v107, %v282
    %284 = vmatprep.subr.mxu0 0.0
    %285 = vmatpush1.msra.mxu0 %v91
    %286 = vmatprep.subr.mxu0 0.0
    %287 = vmatpush1.msra.mxu0 %v92
    %288 = vmatprep.subr.mxu0 0.0
    %289 = vmatpush1.msra.mxu0 %v93
    %290 = vmatprep.subr.mxu0 0.0
    %291 = vmatpush1.msra.mxu0 %v94
    %292 = vmatprep.subr.mxu0 0.0
    %293 = vmatpush1.msra.mxu0 %v95
    %294 = vmatprep.subr.mxu0 0.0
    %295 = vmatpush1.msra.mxu0 %v96
    %296 = vmatprep.subr.mxu0 0.0
    %297 = vmatpush1.msra.mxu0 %v97
    %298 = vmatprep.subr.mxu0 0.0
    %299 = vmatpush1.msra.mxu0 %v98
    %300 = vmatprep.subr.mxu0 0.0
    %301 = vmatpush1.msra.mxu0 %v99
    %302 = vmatprep.subr.mxu0 0.0
    %303 = vmatpush1.msra.mxu0 %v100
    %304 = vmatprep.subr.mxu0 0.0
    %305 = vmatpush1.msra.mxu0 %v101
    %306 = vmatprep.subr.mxu0 0.0
    %307 = vmatpush1.msra.mxu0 %v102
    %308 = vmatprep.subr.mxu0 0.0
    %309 = vmatpush1.msra.mxu0 %v103
    %310 = vmatprep.subr.mxu0 0.0
    %311 = vmatpush1.msra.mxu0 %v104
    %312 = vmatprep.subr.mxu0 0.0
    %313 = vmatpush1.msra.mxu0 %v105
    %314 = vmatprep.subr.mxu0 0.0
    %315 = vmatpush1.msra.mxu0 %v106
    %316 = vmatprep.subr.mxu0 0.0
    %317 = vmatpush1.msra.mxu0 0.0
    %318 = vmatprep.subr.mxu0 0.0
    %319 = vmatpush1.msra.mxu0 0.0
    %320 = vmatprep.subr.mxu0 0.0
    %321 = vmatpush1.msra.mxu0 0.0
    %322 = vmatprep.subr.mxu0 0.0
    %323 = vmatpush1.msra.mxu0 0.0
    %324 = vmatprep.subr.mxu0 0.0
    %325 = vmatpush1.msra.mxu0 0.0
    %326 = vmatprep.subr.mxu0 0.0
    %327 = vmatpush1.msra.mxu0 0.0
    %328 = vmatprep.subr.mxu0 0.0
    %329 = vmatpush1.msra.mxu0 0.0
    %330 = vmatprep.subr.mxu0 0.0
    %331 = vmatpush1.msra.mxu0 0.0
    %332 = vmatprep.subr.mxu0 0.0
    %333 = vmatpush1.msra.mxu0 0.0
    %334 = vmatprep.subr.mxu0 0.0
    %335 = vmatpush1.msra.mxu0 0.0
    %336 = vmatprep.subr.mxu0 0.0
    %337 = vmatpush1.msra.mxu0 0.0
    %338 = vmatprep.subr.mxu0 0.0
    %339 = vmatpush1.msra.mxu0 0.0
    %340 = vmatprep.subr.mxu0 0.0
    %341 = vmatpush1.msra.mxu0 0.0
    %342 = vmatprep.subr.mxu0 0.0
    %343 = vmatpush1.msra.mxu0 0.0
    %344 = vmatprep.subr.mxu0 0.0
    %345 = vmatpush1.msra.mxu0 0.0
    %346 = vmatprep.subr.mxu0 0.0
    %347 = vmatpush1.msra.mxu0 0.0
    %348 = vmatprep.mubr.f32.mxu0 0.0
    %349 = vmatmul.mubr.f32.gmra.mrb[0].mxu0 %v278
    %v350 = vpop.f32.mrb[0].mxu0
    %v351 = vadd.f32 %v283, %v350
    %v352 = vpop.f32.mrb[0].mxu0
    %353 = vmatprep.mubr.f32.mxu0 0.0
    %354 = vmatmul.mubr.f32.gmra.mrb[0].mxu0 %v279
    %v355 = vpop.f32.mrb[0].mxu0
    %v356 = vadd.f32 %v283, %v355
    %v357 = vpop.f32.mrb[0].mxu0
    %358 = vdwg.mxu0
    %v359 = vmul.f32 %v84, %v351
    %v360 = vmul.f32 %v85, %v356
    %361 = vmatprep.subr.mxu0 0.0
    %362 = vmatpush1.msra.mxu0 %v359
    %363 = vmatprep.subr.mxu0 0.0
    %364 = vmatpush1.msra.mxu0 %v360
    %365 = vmatprep.subr.mxu0 0.0
    %366 = vmatpush1.msra.mxu0 0.0
    %367 = vmatprep.subr.mxu0 0.0
    %368 = vmatpush1.msra.mxu0 0.0
    %369 = vmatprep.subr.mxu0 0.0
    %370 = vmatpush1.msra.mxu0 0.0
    %371 = vmatprep.subr.mxu0 0.0
    %372 = vmatpush1.msra.mxu0 0.0
    %373 = vmatprep.subr.mxu0 0.0
    %374 = vmatpush1.msra.mxu0 0.0
    %375 = vmatprep.subr.mxu0 0.0
    %376 = vmatpush1.msra.mxu0 0.0
    %377 = vmatprep.subr.mxu0 0.0
    %378 = vmatpush1.msra.mxu0 0.0
    %379 = vmatprep.subr.mxu0 0.0
    %380 = vmatpush1.msra.mxu0 0.0
    %381 = vmatprep.subr.mxu0 0.0
    %382 = vmatpush1.msra.mxu0 0.0
    %383 = vmatprep.subr.mxu0 0.0
    %384 = vmatpush1.msra.mxu0 0.0
    %385 = vmatprep.subr.mxu0 0.0
    %386 = vmatpush1.msra.mxu0 0.0
    %387 = vmatprep.subr.mxu0 0.0
    %388 = vmatpush1.msra.mxu0 0.0
    %389 = vmatprep.subr.mxu0 0.0
    %390 = vmatpush1.msra.mxu0 0.0
    %391 = vmatprep.subr.mxu0 0.0
    %392 = vmatpush1.msra.mxu0 0.0
    %393 = vmatprep.subr.mxu0 0.0
    %394 = vmatpush1.msra.mxu0 0.0
    %395 = vmatprep.subr.mxu0 0.0
    %396 = vmatpush1.msra.mxu0 0.0
    %397 = vmatprep.subr.mxu0 0.0
    %398 = vmatpush1.msra.mxu0 0.0
    %399 = vmatprep.subr.mxu0 0.0
    %400 = vmatpush1.msra.mxu0 0.0
    %401 = vmatprep.subr.mxu0 0.0
    %402 = vmatpush1.msra.mxu0 0.0
    %403 = vmatprep.subr.mxu0 0.0
    %404 = vmatpush1.msra.mxu0 0.0
    %405 = vmatprep.subr.mxu0 0.0
    %406 = vmatpush1.msra.mxu0 0.0
    %407 = vmatprep.subr.mxu0 0.0
    %408 = vmatpush1.msra.mxu0 0.0
    %409 = vmatprep.subr.mxu0 0.0
    %410 = vmatpush1.msra.mxu0 0.0
    %411 = vmatprep.subr.mxu0 0.0
    %412 = vmatpush1.msra.mxu0 0.0
    %413 = vmatprep.subr.mxu0 0.0
    %414 = vmatpush1.msra.mxu0 0.0
    %415 = vmatprep.subr.mxu0 0.0
    %416 = vmatpush1.msra.mxu0 0.0
    %417 = vmatprep.subr.mxu0 0.0
    %418 = vmatpush1.msra.mxu0 0.0
    %419 = vmatprep.subr.mxu0 0.0
    %420 = vmatpush1.msra.mxu0 0.0
    %421 = vmatprep.subr.mxu0 0.0
    %422 = vmatpush1.msra.mxu0 0.0
    %423 = vmatprep.subr.mxu0 0.0
    %424 = vmatpush1.msra.mxu0 0.0
    %425 = vmatprep.mubr.f32.mxu0 0.0
    %426 = vmatmul.mubr.f32.gmra.mrb[0].mxu0 %v198
    %v427 = vpop.f32.mrb[0].mxu0
    %v428 = vadd.f32 0.0, %v427
    %v429 = vpop.f32.mrb[0].mxu0
    %430 = vmatprep.mubr.f32.mxu0 0.0
    %431 = vmatmul.mubr.f32.gmra.mrb[0].mxu0 %v201
    %v432 = vpop.f32.mrb[0].mxu0
    %v433 = vadd.f32 0.0, %v432
    %v434 = vpop.f32.mrb[0].mxu0
    %435 = vdwg.mxu0
    %v436 = vmax.f32 %v428, 0.0
    %v437 = vmax.f32 %v433, 0.0
    %438 = vst [vmem:[#allocation8] sm:$0xff] %v436
    %439 = vst [vmem:[#allocation8 + $0x8] sm:$0xff] %v437
    // Predicated region
    $region26: #{tpu_custom_call.1} parent=1 // pred_check
      _
    $region27: #{tpu_custom_call.1} parent=1 // pred_check_branch
      %441 = sbr.rel (0) target = $region29
    $region28: #{tpu_custom_call.1} parent=1 // pred_region
      %s443 = ssub.s32 256, 256
      %444 = vsyncadd [#allocation4], %s443
      %s445 = sshll.u32 [#allocation8], 4
      %s446 = int_to_ptr.vmem [resolvable:$true] %s445
      %451 = dma.vmem_to_hbm [thread:$0]  %s446, 256, %s3, [#allocation4], 128, 128, 8
    $region29: #{tpu_custom_call.1} parent=1 // pred_fallthru
      _
    // Predicated region
    $region30: #{tpu_custom_call.1} parent=1 // pred_check
      _
    $region31: #{tpu_custom_call.1} parent=1 // pred_check_branch
      %453 = sbr.rel (0) target = $region33
    $region32: #{tpu_custom_call.1} parent=1 // pred_region
      %454 = dma.done [#allocation4], 256
    $region33: #{tpu_custom_call.1} parent=1 // pred_fallthru
      _
    %455 = vsyncpa [#allocation3], 1
    %456 = vsyncpa [#allocation6], 1
    %457 = vsyncpa [#allocation4], 1

</llo_original>
